<compile_context>
chip_gen: v7x
topology: tpu7x:2x2x1
jax: 0.10.0
libtpu: 0.0.40
codegen_flags: <defaults>
</compile_context>

<pallas_src>
import functools

import jax
import jax.numpy as jnp
from jax.experimental import pallas as pl
from jax.experimental.pallas import tpu as pltpu

_LANE = 128
_SUBLANE = 8
# One value block budget; with double-buffered input + output (~4 live copies)
# this stays well under the scoped-VMEM default on every generation
# (16 MiB v5e, 32 MiB v6e/v7x), so no vmem_limit_bytes override is needed.
_BLOCK_BYTES_BUDGET = 2 * 1024 * 1024


def _constraint_kernel(value_ref, bound_ref, mult_ref, out_ref, *, relation):
    # Works for both layouts:
    #   row layout:        value [TB, N], bound/mult [1, N]
    #   transposed layout: value [N, TL], bound/mult [N, 1]
    # (jnp broadcasting covers both.)
    v = value_ref[...]
    b = bound_ref[...]
    m = jnp.clip(mult_ref[...], 0.0, 100.0)  # Clamp.forward(min=0, max=100)
    if relation in ("ge", "eq"):
        out_ref[...] = (b - v) * m
    elif relation == "le":
        # (v / b - 1) * m  ==  v * (m / b) - m
        # Divide only on the per-constraint slab (N divides instead of B*N).
        coeff = m / b
        out_ref[...] = v * coeff - m
    else:
        raise ValueError(f"Unknown relation: {relation}")


def _pick_tile(dim, row_elems, itemsize, granularity, cap):
    """Largest tile along `dim` (multiple of `granularity`, <= cap) whose value
    block stays within _BLOCK_BYTES_BUDGET. Tiny dims use the full extent."""
    if dim <= granularity:
        return dim
    by_budget = max(granularity, _BLOCK_BYTES_BUDGET // max(1, row_elems * itemsize))
    tile = min(by_budget, cap, dim)
    return max(granularity, (tile // granularity) * granularity)


class Constraint:
    """JAX/Pallas re-implementation of the PyTorch Constraint module (forward)."""

    def __init__(self, bound, relation, name=None, start_val=0.0):
        self.name = name
        if isinstance(bound, (int, float)):
            bound = [float(bound)]
        self.bound = jnp.asarray(bound, dtype=jnp.float32).reshape(-1)   # [N]
        if relation not in {"ge", "le", "eq"}:
            raise ValueError("Unknown relation: {}".format(relation))
        self.relation = relation
        # torch.full((len(bound),), start_val)
        self._multiplier = jnp.full((self.bound.shape[0],), start_val,
                                    dtype=jnp.float32)                    # [N]
        # TODO(synk): PyTorch's Clamp uses a straight-through (identity) backward so
        # _multiplier keeps receiving gradient outside [0, 100]; this forward-only
        # kernel (and jnp.clip) does not define that custom VJP.

    @property
    def multiplier(self):
        return jnp.clip(self._multiplier, 0.0, 100.0)

    def _forward_jnp(self, value, bound, mult):
        m = jnp.clip(mult, 0.0, 100.0)
        if self.relation in ("ge", "eq"):
            loss = bound[None, :] - value
        else:
            loss = value / bound[None, :] - 1.0
        return loss * m[None, :]

    def __call__(self, value):
        value = jnp.asarray(value)
        B, N = value.shape
        dtype = value.dtype
        itemsize = jnp.dtype(dtype).itemsize
        bound = self.bound.astype(dtype)
        mult = self._multiplier.astype(dtype)

        # Tiny problems (< one vreg of work): fixed pallas_call / per-grid-step
        # overhead dwarfs the memory-bound work; let XLA fuse it instead.
        if value.size < _SUBLANE * _LANE:
            return self._forward_jnp(value, bound, mult)

        kernel = functools.partial(_constraint_kernel, relation=self.relation)
        params = pltpu.CompilerParams(dimension_semantics=("parallel",))

        if N < _LANE and B >= _LANE:
            # Lane-dense layout for small constraint dims: batch on the lane axis.
            tile = _pick_tile(B, N, itemsize, _LANE, 2048)
            grid = (pl.cdiv(B, tile),)
            out_t = pl.pallas_call(
                kernel,
                out_shape=jax.ShapeDtypeStruct((N, B), dtype),
                grid=grid,
                in_specs=[
                    pl.BlockSpec((N, tile), lambda i: (0, i)),
                    pl.BlockSpec((N, 1), lambda i: (0, 0)),
                    pl.BlockSpec((N, 1), lambda i: (0, 0)),
                ],
                out_specs=pl.BlockSpec((N, tile), lambda i: (0, i)),
                compiler_params=params,
            )(value.T, bound.reshape(N, 1), mult.reshape(N, 1))
            return out_t.T

        # Standard layout: tile over the batch (sublane) axis, N on lanes.
        tile = _pick_tile(B, N, itemsize, _SUBLANE, 1024)
        grid = (pl.cdiv(B, tile),)
        return pl.pallas_call(
            kernel,
            out_shape=jax.ShapeDtypeStruct((B, N), dtype),
            grid=grid,
            in_specs=[
                pl.BlockSpec((tile, N), lambda i: (i, 0)),
                pl.BlockSpec((1, N), lambda i: (0, 0)),
                pl.BlockSpec((1, N), lambda i: (0, 0)),
            ],
            out_specs=pl.BlockSpec((tile, N), lambda i: (i, 0)),
            compiler_params=params,
        )(value, bound.reshape(1, N), mult.reshape(1, N))


def _reference(value, bound, multiplier, relation):
    m = jnp.clip(multiplier, 0.0, 100.0)
    if relation in ("ge", "eq"):
        loss = bound[None, :] - value
    else:
        loss = value / bound[None, :] - 1.0
    return loss * m[None, :]


if __name__ == "__main__":
    key = jax.random.PRNGKey(0)
    ok = True

    # (case name, B, N) — exercises the pipelined row path, a partial edge
    # block, the lane-dense transposed path (N < 128), and the tiny fallback.
    cases = [
        ("row_pipelined", 2048, 128),
        ("row_partial_edge", 132, 128),
        ("lane_dense_transposed", 600, 4),
        ("tiny_jnp_fallback", 2, 3),
    ]
    # start values chosen to exercise both clamp boundaries (−0.5→0, 150→100).
    rel_and_start = (("ge", -0.5), ("le", 0.5), ("eq", 150.0))

    for case_name, B, N in cases:
        key, k1, k2 = jax.random.split(key, 3)
        value = jax.random.normal(k1, (B, N), dtype=jnp.float32)
        bound_vals = jax.random.uniform(k2, (N,), dtype=jnp.float32,
                                        minval=0.5, maxval=2.0)
        for relation, start_val in rel_and_start:
            mod = Constraint(bound=[float(x) for x in bound_vals],
                             relation=relation, start_val=start_val)
            out = jax.block_until_ready(mod(value))
            ref = _reference(value, mod.bound, mod._multiplier, relation)
            if out.shape != value.shape or not jnp.allclose(out, ref,
                                                            atol=1e-5, rtol=1e-5):
                ok = False
                print(f"MISMATCH: case={case_name} relation={relation} "
                      f"start_val={start_val}")

    if ok:
        print("KERNEL_OK")
</pallas_src>

<mosaic_0001>
module attributes {stable_mosaic.version = 11 : i64} {
  func.func @_constraint_kernel(%arg0: i32, %arg1: memref<1024x128xf32, #tpu.memory_space<vmem>>, %arg2: memref<1x128xf32, #tpu.memory_space<vmem>>, %arg3: memref<1x128xf32, #tpu.memory_space<vmem>>, %arg4: memref<1024x128xf32, #tpu.memory_space<vmem>>) attributes {dimension_semantics = [#tpu.dimension_semantics<parallel>], iteration_bounds = array<i64: 2>, scalar_prefetch = 0 : i64, scratch_operands = 0 : i64, tpu.core_type = #tpu.core_type<tc>, window_params = [{transform_indices = @transform_0, window_bounds = array<i64: 1024, 128>}, {pipeline_mode = #tpu.pipeline_mode<synchronous>, transform_indices = @transform_1, window_bounds = array<i64: 1, 128>}, {pipeline_mode = #tpu.pipeline_mode<synchronous>, transform_indices = @transform_2, window_bounds = array<i64: 1, 128>}, {transform_indices = @transform_3, window_bounds = array<i64: 1024, 128>}]} {
    %c0 = arith.constant 0 : index
    %c0_0 = arith.constant 0 : index
    %0 = vector.load %arg1[%c0, %c0_0] : memref<1024x128xf32, #tpu.memory_space<vmem>>, vector<1024x128xf32>
    %c0_1 = arith.constant 0 : index
    %c0_2 = arith.constant 0 : index
    %1 = vector.load %arg2[%c0_1, %c0_2] : memref<1x128xf32, #tpu.memory_space<vmem>>, vector<1x128xf32>
    %c0_3 = arith.constant 0 : index
    %c0_4 = arith.constant 0 : index
    %2 = vector.load %arg3[%c0_3, %c0_4] : memref<1x128xf32, #tpu.memory_space<vmem>>, vector<1x128xf32>
    %cst = arith.constant 0.000000e+00 : f32
    %cst_5 = arith.constant 1.000000e+02 : f32
    %3 = vector.broadcast %cst : f32 to vector<1x128xf32>
    %4 = arith.maximumf %3, %2 : vector<1x128xf32>
    %5 = vector.broadcast %cst_5 : f32 to vector<1x128xf32>
    %6 = arith.minimumf %5, %4 : vector<1x128xf32>
    %7 = vector.broadcast %1 : vector<1x128xf32> to vector<1024x128xf32>
    %8 = arith.subf %7, %0 : vector<1024x128xf32>
    %9 = vector.broadcast %6 : vector<1x128xf32> to vector<1024x128xf32>
    %10 = arith.mulf %8, %9 : vector<1024x128xf32>
    %c0_6 = arith.constant 0 : index
    %c0_7 = arith.constant 0 : index
    %11 = vector.load %arg4[%c0_6, %c0_7] : memref<1024x128xf32, #tpu.memory_space<vmem>>, vector<1024x128xf32>
    tpu.vector_store %arg4[%c0_6, %c0_7], %10 {strides = array<i32>} : memref<1024x128xf32, #tpu.memory_space<vmem>>, vector<1024x128xf32>,
    return
  }
  func.func @transform_0(%arg0: i32) -> (i32, i32) {
    %c0_i32 = arith.constant 0 : i32
    %c0_i32_0 = arith.constant 0 : i32
    return %arg0, %c0_i32 : i32, i32
  }
  func.func @transform_1(%arg0: i32) -> (i32, i32) {
    %c0_i32 = arith.constant 0 : i32
    %c0_i32_0 = arith.constant 0 : i32
    %c0_i32_1 = arith.constant 0 : i32
    return %c0_i32, %c0_i32_0 : i32, i32
  }
  func.func @transform_2(%arg0: i32) -> (i32, i32) {
    %c0_i32 = arith.constant 0 : i32
    %c0_i32_0 = arith.constant 0 : i32
    %c0_i32_1 = arith.constant 0 : i32
    return %c0_i32, %c0_i32_0 : i32, i32
  }
  func.func @transform_3(%arg0: i32) -> (i32, i32) {
    %c0_i32 = arith.constant 0 : i32
    %c0_i32_0 = arith.constant 0 : i32
    return %arg0, %c0_i32 : i32, i32
  }
}

</mosaic_0001>

<llo_original>
// kernel: tpu_custom_call.1
$region0: #{tpu_custom_call.1}
  #allocation0 [shape = 'u32[]', space=smem, size = 0x4, offset = 0x4, fixed_abs, tag = 'smem constant byte address 0x4 - core index']
  #allocation1 [shape = 'u32[144,128]{1,0:T(1,128)}', space=vmem, size = 0x12000, scoped, tag = 'internal scratch']
  %s0 = inlined_call_operand.hbm [shape: f32[2048,128], index: 0, kind: input, shape index: {}]
  %s1 = inlined_call_operand.vmem [shape: f32[1,128], index: 1, kind: input, shape index: {}]
  %s2 = inlined_call_operand.vmem [shape: f32[1,128], index: 2, kind: input, shape index: {}]
  %s3 = inlined_call_operand.hbm [shape: f32[2048,128], index: 3, kind: output, shape index: {}]
  %s4 = sld [smem:[#allocation0]]
  $region49: #{tpu_custom_call.1} parent=0
    _
  %s6 = ssub.s32 1, %s4
  %s7 = scalar_select 0, %s6, %s4
  $region1: #{tpu_custom_call.1} parent=0
    #allocation2 [shape = 'u8[1048576]{0}', space=vmem, size = 0x100000, scoped, tag = 'input window, operand 0']
    #allocation3 [shape = 's32[2]{0}', space=sflag, size = 0x8, scoped, tag = 'scoped memory for tpu_custom_call.1']
    #allocation4 [shape = 's32[2]{0}', space=sflag, size = 0x8, scoped, tag = 'scoped memory for tpu_custom_call.1']
    #allocation5 [shape = 'u8[1048576]{0}', space=vmem, size = 0x100000, scoped, tag = 'output window, operand 0']
    %8 = vsyncpa [#allocation3], 0
    %s9 = scalar_lea.sflag [#allocation3], 1
    %10 = vsyncpa %s9, 0
    %11 = vsyncpa [#allocation4], 0
    %s12 = scalar_lea.sflag [#allocation4], 1
    %13 = vsyncpa %s12, 0
    loop: start=0, step=1, limit=4
    $region2: #{tpu_custom_call.1} parent=1 // loop_pre_header
      _
    $region3: #{tpu_custom_call.1} parent=1 // loop_header
      %s15 = sphi 0, %s19
      %p16 = scmp.ge.s32.totalorder %s15, 4
      %s25 = sphi 0, %s27
      %s28 = sphi 0, %s25
      %s29 = sphi 0, %s28
      %s45 = sphi 0, %s29
      %s49 = sphi 0, %s49
      %s51 = sphi 0, %s49
      %s52 = sphi 0, %s51
      %s66 = sphi 0, %s52
      %s70 = sphi 0, %s70
      %s72 = sphi 0, %s70
      %s73 = sphi 0, %s72
      %s87 = sphi 0, %s73
      %s93 = sphi 0, %s95
      %s96 = sphi 0, %s93
      %s97 = sphi 0, %s96
      %s113 = sphi 0, %s97
    $region4: #{tpu_custom_call.1} parent=1 // loop_header_branch
      %18 = sbr.rel (%p16) target = $region8
    $region5: #{tpu_custom_call.1} parent=1 // loop_body
      %s20 = ssub.s32 %s15, 1
      %s21 = ssub.s32 %s15, 2
      %s22 = sadd.s32 %s15, 1
      %s23 = ssub.s32 %s15, %s22
      %p24 = scmp.eq.s32.totalorder %s23, 0
      %s26 = sadd.s32 %s25, 1
      %s27 = scalar_select %p24, %s25, %s26
      %p30 = pneg %p24
      %p31 = scmp.eq.s32.totalorder %s15, 1
      %p32 = por %p30, %p31
      %p33 = scmp.ne.s32.totalorder %s25, %s28
      %p34 = scmp.eq.s32.totalorder %s15, 0
      %p35 = por %p33, %p34
      %p36 = scmp.ne.s32.totalorder %s25, %s28
      %p37 = scmp.eq.s32.totalorder %s20, 1
      %p38 = por %p36, %p37
      %p39 = scmp.ne.s32.totalorder %s28, %s29
      %p40 = scmp.eq.s32.totalorder %s20, 0
      %p41 = por %p39, %p40
      %p42 = scmp.ne.s32.totalorder %s28, %s29
      %p43 = scmp.eq.s32.totalorder %s21, 1
      %p44 = por %p42, %p43
      %p46 = scmp.ne.s32.totalorder %s29, %s45
      %p47 = scmp.eq.s32.totalorder %s21, 0
      %p48 = por %p46, %p47
      %s50 = sadd.s32 %s49, 1
      %p53 = scmp.eq.s32.totalorder %s15, 1
      %p54 = scmp.ne.s32.totalorder %s49, %s51
      %p55 = scmp.eq.s32.totalorder %s15, 0
      %p56 = por %p54, %p55
      %p57 = scmp.ne.s32.totalorder %s49, %s51
      %p58 = scmp.eq.s32.totalorder %s20, 1
      %p59 = por %p57, %p58
      %p60 = scmp.ne.s32.totalorder %s51, %s52
      %p61 = scmp.eq.s32.totalorder %s20, 0
      %p62 = por %p60, %p61
      %p63 = scmp.ne.s32.totalorder %s51, %s52
      %p64 = scmp.eq.s32.totalorder %s21, 1
      %p65 = por %p63, %p64
      %p67 = scmp.ne.s32.totalorder %s52, %s66
      %p68 = scmp.eq.s32.totalorder %s21, 0
      %p69 = por %p67, %p68
      %s71 = sadd.s32 %s70, 1
      %p74 = scmp.eq.s32.totalorder %s15, 1
      %p75 = scmp.ne.s32.totalorder %s70, %s72
      %p76 = scmp.eq.s32.totalorder %s15, 0
      %p77 = por %p75, %p76
      %p78 = scmp.ne.s32.totalorder %s70, %s72
      %p79 = scmp.eq.s32.totalorder %s20, 1
      %p80 = por %p78, %p79
      %p81 = scmp.ne.s32.totalorder %s72, %s73
      %p82 = scmp.eq.s32.totalorder %s20, 0
      %p83 = por %p81, %p82
      %p84 = scmp.ne.s32.totalorder %s72, %s73
      %p85 = scmp.eq.s32.totalorder %s21, 1
      %p86 = por %p84, %p85
      %p88 = scmp.ne.s32.totalorder %s73, %s87
      %p89 = scmp.eq.s32.totalorder %s21, 0
      %p90 = por %p88, %p89
      %s91 = ssub.s32 %s15, %s22
      %p92 = scmp.eq.s32.totalorder %s91, 0
      %s94 = sadd.s32 %s93, 1
      %s95 = scalar_select %p92, %s93, %s94
      %p98 = pneg %p92
      %p99 = scmp.eq.s32.totalorder %s15, 1
      %p100 = por %p98, %p99
      %p101 = scmp.ne.s32.totalorder %s93, %s96
      %p102 = scmp.eq.s32.totalorder %s15, 0
      %p103 = por %p101, %p102
      %p104 = scmp.ne.s32.totalorder %s93, %s96
      %p105 = scmp.eq.s32.totalorder %s20, 1
      %p106 = por %p104, %p105
      %p107 = scmp.ne.s32.totalorder %s96, %s97
      %p108 = scmp.eq.s32.totalorder %s20, 0
      %p109 = por %p107, %p108
      %p110 = scmp.ne.s32.totalorder %s96, %s97
      %p111 = scmp.eq.s32.totalorder %s21, 1
      %p112 = por %p110, %p111
      %p114 = scmp.ne.s32.totalorder %s97, %s113
      %p115 = scmp.eq.s32.totalorder %s21, 0
      %p116 = por %p114, %p115
      %p117 = scmp.le.s32.totalorder 1, %s15
      %p118 = scmp.lt.s32.totalorder %s15, 3
      %p119 = pnand %p117, %p118
      %p120 = pneg %p119
      // Predicated region
      $region9: #{tpu_custom_call.1} parent=5 // pred_check
        _
      $region10: #{tpu_custom_call.1} parent=5 // pred_check_branch
        %122 = sbr.rel (%p119) target = $region12
      $region11: #{tpu_custom_call.1} parent=5 // pred_region
        %s123 = ssub.s32 %s15, 1
        // Predicated region
        $region13: #{tpu_custom_call.1} parent=11 // pred_check
          %p124 = pneg %p62
        $region14: #{tpu_custom_call.1} parent=11 // pred_check_branch
          %126 = sbr.rel (%p124) target = $region16
        $region15: #{tpu_custom_call.1} parent=11 // pred_region
          _
        $region16: #{tpu_custom_call.1} parent=11 // pred_fallthru
          _
        // Predicated region
        $region17: #{tpu_custom_call.1} parent=11 // pred_check
          %p127 = pneg %p83
        $region18: #{tpu_custom_call.1} parent=11 // pred_check_branch
          %129 = sbr.rel (%p127) target = $region20
        $region19: #{tpu_custom_call.1} parent=11 // pred_region
          _
        $region20: #{tpu_custom_call.1} parent=11 // pred_fallthru
          _
      $region12: #{tpu_custom_call.1} parent=5 // pred_fallthru
        _
      %p130 = scmp.lt.s32.totalorder %s15, 2
      // Predicated region
      $region21: #{tpu_custom_call.1} parent=5 // pred_check
        %p131 = pneg %p130
      $region22: #{tpu_custom_call.1} parent=5 // pred_check_branch
        %133 = sbr.rel (%p131) target = $region24
      $region23: #{tpu_custom_call.1} parent=5 // pred_region
        // Predicated region
        $region25: #{tpu_custom_call.1} parent=23 // pred_check
          %p134 = pneg %p35
        $region26: #{tpu_custom_call.1} parent=23 // pred_check_branch
          %136 = sbr.rel (%p134) target = $region28
        $region27: #{tpu_custom_call.1} parent=23 // pred_region
          %s137 = sand.u32 %s25, 1
          %s138 = scalar_lea.sflag [#allocation3], %s137
          %s139 = sand.u32 %s25, 1
          %s140 = smul.addr %s139, 1024
          %s141 = scalar_lea.vmem [#allocation2], %s140
          %s142 = smul.u32 128, %s15
          %s144 = ssub.s32 16384, 16384
          %145 = vsyncadd %s138, %s144
          %s146 = smul.addr %s142, 128
          %s147 = scalar_lea.hbm %s0, %s146
          %s148 = sshll.u32 %s141, 4
          %s149 = int_to_ptr.vmem [resolvable:$true] %s148
          %154 = dma.hbm_to_vmem [thread:$0]  %s147, 16384, %s149, %s138, 128, 128, 8
        $region28: #{tpu_custom_call.1} parent=23 // pred_fallthru
          _
      $region24: #{tpu_custom_call.1} parent=5 // pred_fallthru
        _
      %p155 = scmp.le.s32.totalorder 1, %s15
      %p156 = scmp.lt.s32.totalorder %s15, 3
      %p157 = pnand %p155, %p156
      %p158 = pneg %p157
      // Predicated region
      $region29: #{tpu_custom_call.1} parent=5 // pred_check
        _
      $region30: #{tpu_custom_call.1} parent=5 // pred_check_branch
        %160 = sbr.rel (%p157) target = $region32
      $region31: #{tpu_custom_call.1} parent=5 // pred_region
        %s161 = ssub.s32 %s15, 1
        %s162 = sand.u32 %s28, 1
        %s163 = scalar_lea.sflag [#allocation3], %s162
        %s164 = sand.u32 %s28, 1
        %s165 = smul.addr %s164, 1024
        %s166 = scalar_lea.vmem [#allocation2], %s165
        // Predicated region
        $region33: #{tpu_custom_call.1} parent=31 // pred_check
          %p167 = pneg %p41
        $region34: #{tpu_custom_call.1} parent=31 // pred_check_branch
          %169 = sbr.rel (%p167) target = $region36
        $region35: #{tpu_custom_call.1} parent=31 // pred_region
          %170 = dma.done %s163, 16384
        $region36: #{tpu_custom_call.1} parent=31 // pred_fallthru
          _
        %s171 = sand.u32 %s28, 1
        %s172 = scalar_lea.sflag [#allocation3], %s171
        %s173 = sand.u32 %s28, 1
        %s174 = smul.addr %s173, 1024
        %s175 = scalar_lea.vmem [#allocation2], %s174
        %p176 = pneg %p41
        %p177 = pneg %p38
        %p178 = pneg %p62
        %p179 = pneg %p59
        %p180 = pneg %p83
        %p181 = pneg %p80
        %p182 = pneg %p109
        %p183 = pneg %p106
        %s184 = sand.u32 %s96, 1
        %s185 = scalar_lea.sflag [#allocation4], %s184
        %s186 = sand.u32 %s96, 1
        %s187 = smul.addr %s186, 1024
        %s188 = scalar_lea.vmem [#allocation5], %s187
        %s189 = smul.u32 128, %s20
        %s190 = smul.u32 128, %s20
        %v191 = vld [vmem:[%s166] sm:$0xff]
        %v192 = vld [vmem:[%s166 + $0x8] sm:$0xff]
        %v193 = vld [vmem:[%s166 + $0x10] sm:$0xff]
        %v194 = vld [vmem:[%s166 + $0x18] sm:$0xff]
        %v195 = vld [vmem:[%s166 + $0x20] sm:$0xff]
        %v196 = vld [vmem:[%s166 + $0x28] sm:$0xff]
        %v197 = vld [vmem:[%s166 + $0x30] sm:$0xff]
        %v198 = vld [vmem:[%s166 + $0x38] sm:$0xff]
        %v199 = vld [vmem:[%s166 + $0x40] sm:$0xff]
        %v200 = vld [vmem:[%s166 + $0x48] sm:$0xff]
        %v201 = vld [vmem:[%s166 + $0x50] sm:$0xff]
        %v202 = vld [vmem:[%s166 + $0x58] sm:$0xff]
        %v203 = vld [vmem:[%s166 + $0x60] sm:$0xff]
        %v204 = vld [vmem:[%s166 + $0x68] sm:$0xff]
        %v205 = vld [vmem:[%s166 + $0x70] sm:$0xff]
        %v206 = vld [vmem:[%s166 + $0x78] sm:$0xff]
        %v207 = vld [vmem:[%s166 + $0x80] sm:$0xff]
        %v208 = vld [vmem:[%s166 + $0x88] sm:$0xff]
        %v209 = vld [vmem:[%s166 + $0x90] sm:$0xff]
        %v210 = vld [vmem:[%s166 + $0x98] sm:$0xff]
        %v211 = vld [vmem:[%s166 + $0xa0] sm:$0xff]
        %v212 = vld [vmem:[%s166 + $0xa8] sm:$0xff]
        %v213 = vld [vmem:[%s166 + $0xb0] sm:$0xff]
        %v214 = vld [vmem:[%s166 + $0xb8] sm:$0xff]
        %v215 = vld [vmem:[%s166 + $0xc0] sm:$0xff]
        %v216 = vld [vmem:[%s166 + $0xc8] sm:$0xff]
        %v217 = vld [vmem:[%s166 + $0xd0] sm:$0xff]
        %v218 = vld [vmem:[%s166 + $0xd8] sm:$0xff]
        %v219 = vld [vmem:[%s166 + $0xe0] sm:$0xff]
        %v220 = vld [vmem:[%s166 + $0xe8] sm:$0xff]
        %v221 = vld [vmem:[%s166 + $0xf0] sm:$0xff]
        %v222 = vld [vmem:[%s166 + $0xf8] sm:$0xff]
        %v223 = vld [vmem:[%s166 + $0x100] sm:$0xff]
        %v224 = vld [vmem:[%s166 + $0x108] sm:$0xff]
        %v225 = vld [vmem:[%s166 + $0x110] sm:$0xff]
        %v226 = vld [vmem:[%s166 + $0x118] sm:$0xff]
        %v227 = vld [vmem:[%s166 + $0x120] sm:$0xff]
        %v228 = vld [vmem:[%s166 + $0x128] sm:$0xff]
        %v229 = vld [vmem:[%s166 + $0x130] sm:$0xff]
        %v230 = vld [vmem:[%s166 + $0x138] sm:$0xff]
        %v231 = vld [vmem:[%s166 + $0x140] sm:$0xff]
        %v232 = vld [vmem:[%s166 + $0x148] sm:$0xff]
        %v233 = vld [vmem:[%s166 + $0x150] sm:$0xff]
        %v234 = vld [vmem:[%s166 + $0x158] sm:$0xff]
        %v235 = vld [vmem:[%s166 + $0x160] sm:$0xff]
        %v236 = vld [vmem:[%s166 + $0x168] sm:$0xff]
        %v237 = vld [vmem:[%s166 + $0x170] sm:$0xff]
        %v238 = vld [vmem:[%s166 + $0x178] sm:$0xff]
        %v239 = vld [vmem:[%s166 + $0x180] sm:$0xff]
        %v240 = vld [vmem:[%s166 + $0x188] sm:$0xff]
        %v241 = vld [vmem:[%s166 + $0x190] sm:$0xff]
        %v242 = vld [vmem:[%s166 + $0x198] sm:$0xff]
        %v243 = vld [vmem:[%s166 + $0x1a0] sm:$0xff]
        %v244 = vld [vmem:[%s166 + $0x1a8] sm:$0xff]
        %v245 = vld [vmem:[%s166 + $0x1b0] sm:$0xff]
        %v246 = vld [vmem:[%s166 + $0x1b8] sm:$0xff]
        %v247 = vld [vmem:[%s166 + $0x1c0] sm:$0xff]
        %v248 = vld [vmem:[%s166 + $0x1c8] sm:$0xff]
        %v249 = vld [vmem:[%s166 + $0x1d0] sm:$0xff]
        %v250 = vld [vmem:[%s166 + $0x1d8] sm:$0xff]
        %v251 = vld [vmem:[%s166 + $0x1e0] sm:$0xff]
        %v252 = vld [vmem:[%s166 + $0x1e8] sm:$0xff]
        %v253 = vld [vmem:[%s166 + $0x1f0] sm:$0xff]
        %v254 = vld [vmem:[%s166 + $0x1f8] sm:$0xff]
        %v255 = vld [vmem:[%s166 + $0x200] sm:$0xff]
        %v256 = vld [vmem:[%s166 + $0x208] sm:$0xff]
        %v257 = vld [vmem:[%s166 + $0x210] sm:$0xff]
        %v258 = vld [vmem:[%s166 + $0x218] sm:$0xff]
        %v259 = vld [vmem:[%s166 + $0x220] sm:$0xff]
        %v260 = vld [vmem:[%s166 + $0x228] sm:$0xff]
        %v261 = vld [vmem:[%s166 + $0x230] sm:$0xff]
        %v262 = vld [vmem:[%s166 + $0x238] sm:$0xff]
        %v263 = vld [vmem:[%s166 + $0x240] sm:$0xff]
        %v264 = vld [vmem:[%s166 + $0x248] sm:$0xff]
        %v265 = vld [vmem:[%s166 + $0x250] sm:$0xff]
        %v266 = vld [vmem:[%s166 + $0x258] sm:$0xff]
        %v267 = vld [vmem:[%s166 + $0x260] sm:$0xff]
        %v268 = vld [vmem:[%s166 + $0x268] sm:$0xff]
        %v269 = vld [vmem:[%s166 + $0x270] sm:$0xff]
        %v270 = vld [vmem:[%s166 + $0x278] sm:$0xff]
        %v271 = vld [vmem:[%s166 + $0x280] sm:$0xff]
        %v272 = vld [vmem:[%s166 + $0x288] sm:$0xff]
        %v273 = vld [vmem:[%s166 + $0x290] sm:$0xff]
        %v274 = vld [vmem:[%s166 + $0x298] sm:$0xff]
        %v275 = vld [vmem:[%s166 + $0x2a0] sm:$0xff]
        %v276 = vld [vmem:[%s166 + $0x2a8] sm:$0xff]
        %v277 = vld [vmem:[%s166 + $0x2b0] sm:$0xff]
        %v278 = vld [vmem:[%s166 + $0x2b8] sm:$0xff]
        %v279 = vld [vmem:[%s166 + $0x2c0] sm:$0xff]
        %v280 = vld [vmem:[%s166 + $0x2c8] sm:$0xff]
        %v281 = vld [vmem:[%s166 + $0x2d0] sm:$0xff]
        %v282 = vld [vmem:[%s166 + $0x2d8] sm:$0xff]
        %v283 = vld [vmem:[%s166 + $0x2e0] sm:$0xff]
        %v284 = vld [vmem:[%s166 + $0x2e8] sm:$0xff]
        %v285 = vld [vmem:[%s166 + $0x2f0] sm:$0xff]
        %v286 = vld [vmem:[%s166 + $0x2f8] sm:$0xff]
        %v287 = vld [vmem:[%s166 + $0x300] sm:$0xff]
        %v288 = vld [vmem:[%s166 + $0x308] sm:$0xff]
        %v289 = vld [vmem:[%s166 + $0x310] sm:$0xff]
        %v290 = vld [vmem:[%s166 + $0x318] sm:$0xff]
        %v291 = vld [vmem:[%s166 + $0x320] sm:$0xff]
        %v292 = vld [vmem:[%s166 + $0x328] sm:$0xff]
        %v293 = vld [vmem:[%s166 + $0x330] sm:$0xff]
        %v294 = vld [vmem:[%s166 + $0x338] sm:$0xff]
        %v295 = vld [vmem:[%s166 + $0x340] sm:$0xff]
        %v296 = vld [vmem:[%s166 + $0x348] sm:$0xff]
        %v297 = vld [vmem:[%s166 + $0x350] sm:$0xff]
        %v298 = vld [vmem:[%s166 + $0x358] sm:$0xff]
        %v299 = vld [vmem:[%s166 + $0x360] sm:$0xff]
        %v300 = vld [vmem:[%s166 + $0x368] sm:$0xff]
        %v301 = vld [vmem:[%s166 + $0x370] sm:$0xff]
        %v302 = vld [vmem:[%s166 + $0x378] sm:$0xff]
        %v303 = vld [vmem:[%s166 + $0x380] sm:$0xff]
        %v304 = vld [vmem:[%s166 + $0x388] sm:$0xff]
        %v305 = vld [vmem:[%s166 + $0x390] sm:$0xff]
        %v306 = vld [vmem:[%s166 + $0x398] sm:$0xff]
        %v307 = vld [vmem:[%s166 + $0x3a0] sm:$0xff]
        %v308 = vld [vmem:[%s166 + $0x3a8] sm:$0xff]
        %v309 = vld [vmem:[%s166 + $0x3b0] sm:$0xff]
        %v310 = vld [vmem:[%s166 + $0x3b8] sm:$0xff]
        %v311 = vld [vmem:[%s166 + $0x3c0] sm:$0xff]
        %v312 = vld [vmem:[%s166 + $0x3c8] sm:$0xff]
        %v313 = vld [vmem:[%s166 + $0x3d0] sm:$0xff]
        %v314 = vld [vmem:[%s166 + $0x3d8] sm:$0xff]
        %v315 = vld [vmem:[%s166 + $0x3e0] sm:$0xff]
        %v316 = vld [vmem:[%s166 + $0x3e8] sm:$0xff]
        %v317 = vld [vmem:[%s166 + $0x3f0] sm:$0xff]
        %v318 = vld [vmem:[%s166 + $0x3f8] sm:$0xff]
        %v319 = vld [vmem:[%s1] sm:$0x1]
        %v320 = vld [vmem:[%s2] sm:$0x1]
        %v321 = vmax.f32 %v320, 0.0
        %v322 = vmin.f32 %v321, 100.0
        %v324 = vlaneseq
        %v325 = vshrl.u32 %v324, 7
        %v326 = vsub.s32 0, %v325
        %v327 = vrot.slane %v319, %v326
        %v329 = vsub.f32 %v327, %v191
        %v330 = vsub.f32 %v327, %v192
        %v331 = vsub.f32 %v327, %v193
        %v332 = vsub.f32 %v327, %v194
        %v333 = vsub.f32 %v327, %v195
        %v334 = vsub.f32 %v327, %v196
        %v335 = vsub.f32 %v327, %v197
        %v336 = vsub.f32 %v327, %v198
        %v337 = vsub.f32 %v327, %v199
        %v338 = vsub.f32 %v327, %v200
        %v339 = vsub.f32 %v327, %v201
        %v340 = vsub.f32 %v327, %v202
        %v341 = vsub.f32 %v327, %v203
        %v342 = vsub.f32 %v327, %v204
        %v343 = vsub.f32 %v327, %v205
        %v344 = vsub.f32 %v327, %v206
        %v345 = vsub.f32 %v327, %v207
        %v346 = vsub.f32 %v327, %v208
        %v347 = vsub.f32 %v327, %v209
        %v348 = vsub.f32 %v327, %v210
        %v349 = vsub.f32 %v327, %v211
        %v350 = vsub.f32 %v327, %v212
        %v351 = vsub.f32 %v327, %v213
        %v352 = vsub.f32 %v327, %v214
        %v353 = vsub.f32 %v327, %v215
        %v354 = vsub.f32 %v327, %v216
        %v355 = vsub.f32 %v327, %v217
        %v356 = vsub.f32 %v327, %v218
        %v357 = vsub.f32 %v327, %v219
        %v358 = vsub.f32 %v327, %v220
        %v359 = vsub.f32 %v327, %v221
        %v360 = vsub.f32 %v327, %v222
        %v361 = vsub.f32 %v327, %v223
        %v362 = vsub.f32 %v327, %v224
        %v363 = vsub.f32 %v327, %v225
        %v364 = vsub.f32 %v327, %v226
        %v365 = vsub.f32 %v327, %v227
        %v366 = vsub.f32 %v327, %v228
        %v367 = vsub.f32 %v327, %v229
        %v368 = vsub.f32 %v327, %v230
        %v369 = vsub.f32 %v327, %v231
        %v370 = vsub.f32 %v327, %v232
        %v371 = vsub.f32 %v327, %v233
        %v372 = vsub.f32 %v327, %v234
        %v373 = vsub.f32 %v327, %v235
        %v374 = vsub.f32 %v327, %v236
        %v375 = vsub.f32 %v327, %v237
        %v376 = vsub.f32 %v327, %v238
        %v377 = vsub.f32 %v327, %v239
        %v378 = vsub.f32 %v327, %v240
        %v379 = vsub.f32 %v327, %v241
        %v380 = vsub.f32 %v327, %v242
        %v381 = vsub.f32 %v327, %v243
        %v382 = vsub.f32 %v327, %v244
        %v383 = vsub.f32 %v327, %v245
        %v384 = vsub.f32 %v327, %v246
        %v385 = vsub.f32 %v327, %v247
        %v386 = vsub.f32 %v327, %v248
        %v387 = vsub.f32 %v327, %v249
        %v388 = vsub.f32 %v327, %v250
        %v389 = vsub.f32 %v327, %v251
        %v390 = vsub.f32 %v327, %v252
        %v391 = vsub.f32 %v327, %v253
        %v392 = vsub.f32 %v327, %v254
        %v393 = vsub.f32 %v327, %v255
        %v394 = vsub.f32 %v327, %v256
        %v395 = vsub.f32 %v327, %v257
        %v396 = vsub.f32 %v327, %v258
        %v397 = vsub.f32 %v327, %v259
        %v398 = vsub.f32 %v327, %v260
        %v399 = vsub.f32 %v327, %v261
        %v400 = vsub.f32 %v327, %v262
        %v401 = vsub.f32 %v327, %v263
        %v402 = vsub.f32 %v327, %v264
        %v403 = vsub.f32 %v327, %v265
        %v404 = vsub.f32 %v327, %v266
        %v405 = vsub.f32 %v327, %v267
        %v406 = vsub.f32 %v327, %v268
        %v407 = vsub.f32 %v327, %v269
        %v408 = vsub.f32 %v327, %v270
        %v409 = vsub.f32 %v327, %v271
        %v410 = vsub.f32 %v327, %v272
        %v411 = vsub.f32 %v327, %v273
        %v412 = vsub.f32 %v327, %v274
        %v413 = vsub.f32 %v327, %v275
        %v414 = vsub.f32 %v327, %v276
        %v415 = vsub.f32 %v327, %v277
        %v416 = vsub.f32 %v327, %v278
        %v417 = vsub.f32 %v327, %v279
        %v418 = vsub.f32 %v327, %v280
        %v419 = vsub.f32 %v327, %v281
        %v420 = vsub.f32 %v327, %v282
        %v421 = vsub.f32 %v327, %v283
        %v422 = vsub.f32 %v327, %v284
        %v423 = vsub.f32 %v327, %v285
        %v424 = vsub.f32 %v327, %v286
        %v425 = vsub.f32 %v327, %v287
        %v426 = vsub.f32 %v327, %v288
        %v427 = vsub.f32 %v327, %v289
        %v428 = vsub.f32 %v327, %v290
        %v429 = vsub.f32 %v327, %v291
        %v430 = vsub.f32 %v327, %v292
        %v431 = vsub.f32 %v327, %v293
        %v432 = vsub.f32 %v327, %v294
        %v433 = vsub.f32 %v327, %v295
        %v434 = vsub.f32 %v327, %v296
        %v435 = vsub.f32 %v327, %v297
        %v436 = vsub.f32 %v327, %v298
        %v437 = vsub.f32 %v327, %v299
        %v438 = vsub.f32 %v327, %v300
        %v439 = vsub.f32 %v327, %v301
        %v440 = vsub.f32 %v327, %v302
        %v441 = vsub.f32 %v327, %v303
        %v442 = vsub.f32 %v327, %v304
        %v443 = vsub.f32 %v327, %v305
        %v444 = vsub.f32 %v327, %v306
        %v445 = vsub.f32 %v327, %v307
        %v446 = vsub.f32 %v327, %v308
        %v447 = vsub.f32 %v327, %v309
        %v448 = vsub.f32 %v327, %v310
        %v449 = vsub.f32 %v327, %v311
        %v450 = vsub.f32 %v327, %v312
        %v451 = vsub.f32 %v327, %v313
        %v452 = vsub.f32 %v327, %v314
        %v453 = vsub.f32 %v327, %v315
        %v454 = vsub.f32 %v327, %v316
        %v455 = vsub.f32 %v327, %v317
        %v456 = vsub.f32 %v327, %v318
        %v458 = vlaneseq
        %v459 = vshrl.u32 %v458, 7
        %v460 = vsub.s32 0, %v459
        %v461 = vrot.slane %v322, %v460
        %v463 = vmul.f32 %v329, %v461
        %v464 = vmul.f32 %v330, %v461
        %v465 = vmul.f32 %v331, %v461
        %v466 = vmul.f32 %v332, %v461
        %v467 = vmul.f32 %v333, %v461
        %v468 = vmul.f32 %v334, %v461
        %v469 = vmul.f32 %v335, %v461
        %v470 = vmul.f32 %v336, %v461
        %v471 = vmul.f32 %v337, %v461
        %v472 = vmul.f32 %v338, %v461
        %v473 = vmul.f32 %v339, %v461
        %v474 = vmul.f32 %v340, %v461
        %v475 = vmul.f32 %v341, %v461
        %v476 = vmul.f32 %v342, %v461
        %v477 = vmul.f32 %v343, %v461
        %v478 = vmul.f32 %v344, %v461
        %v479 = vmul.f32 %v345, %v461
        %v480 = vmul.f32 %v346, %v461
        %v481 = vmul.f32 %v347, %v461
        %v482 = vmul.f32 %v348, %v461
        %v483 = vmul.f32 %v349, %v461
        %v484 = vmul.f32 %v350, %v461
        %v485 = vmul.f32 %v351, %v461
        %v486 = vmul.f32 %v352, %v461
        %v487 = vmul.f32 %v353, %v461
        %v488 = vmul.f32 %v354, %v461
        %v489 = vmul.f32 %v355, %v461
        %v490 = vmul.f32 %v356, %v461
        %v491 = vmul.f32 %v357, %v461
        %v492 = vmul.f32 %v358, %v461
        %v493 = vmul.f32 %v359, %v461
        %v494 = vmul.f32 %v360, %v461
        %v495 = vmul.f32 %v361, %v461
        %v496 = vmul.f32 %v362, %v461
        %v497 = vmul.f32 %v363, %v461
        %v498 = vmul.f32 %v364, %v461
        %v499 = vmul.f32 %v365, %v461
        %v500 = vmul.f32 %v366, %v461
        %v501 = vmul.f32 %v367, %v461
        %v502 = vmul.f32 %v368, %v461
        %v503 = vmul.f32 %v369, %v461
        %v504 = vmul.f32 %v370, %v461
        %v505 = vmul.f32 %v371, %v461
        %v506 = vmul.f32 %v372, %v461
        %v507 = vmul.f32 %v373, %v461
        %v508 = vmul.f32 %v374, %v461
        %v509 = vmul.f32 %v375, %v461
        %v510 = vmul.f32 %v376, %v461
        %v511 = vmul.f32 %v377, %v461
        %v512 = vmul.f32 %v378, %v461
        %v513 = vmul.f32 %v379, %v461
        %v514 = vmul.f32 %v380, %v461
        %v515 = vmul.f32 %v381, %v461
        %v516 = vmul.f32 %v382, %v461
        %v517 = vmul.f32 %v383, %v461
        %v518 = vmul.f32 %v384, %v461
        %v519 = vmul.f32 %v385, %v461
        %v520 = vmul.f32 %v386, %v461
        %v521 = vmul.f32 %v387, %v461
        %v522 = vmul.f32 %v388, %v461
        %v523 = vmul.f32 %v389, %v461
        %v524 = vmul.f32 %v390, %v461
        %v525 = vmul.f32 %v391, %v461
        %v526 = vmul.f32 %v392, %v461
        %v527 = vmul.f32 %v393, %v461
        %v528 = vmul.f32 %v394, %v461
        %v529 = vmul.f32 %v395, %v461
        %v530 = vmul.f32 %v396, %v461
        %v531 = vmul.f32 %v397, %v461
        %v532 = vmul.f32 %v398, %v461
        %v533 = vmul.f32 %v399, %v461
        %v534 = vmul.f32 %v400, %v461
        %v535 = vmul.f32 %v401, %v461
        %v536 = vmul.f32 %v402, %v461
        %v537 = vmul.f32 %v403, %v461
        %v538 = vmul.f32 %v404, %v461
        %v539 = vmul.f32 %v405, %v461
        %v540 = vmul.f32 %v406, %v461
        %v541 = vmul.f32 %v407, %v461
        %v542 = vmul.f32 %v408, %v461
        %v543 = vmul.f32 %v409, %v461
        %v544 = vmul.f32 %v410, %v461
        %v545 = vmul.f32 %v411, %v461
        %v546 = vmul.f32 %v412, %v461
        %v547 = vmul.f32 %v413, %v461
        %v548 = vmul.f32 %v414, %v461
        %v549 = vmul.f32 %v415, %v461
        %v550 = vmul.f32 %v416, %v461
        %v551 = vmul.f32 %v417, %v461
        %v552 = vmul.f32 %v418, %v461
        %v553 = vmul.f32 %v419, %v461
        %v554 = vmul.f32 %v420, %v461
        %v555 = vmul.f32 %v421, %v461
        %v556 = vmul.f32 %v422, %v461
        %v557 = vmul.f32 %v423, %v461
        %v558 = vmul.f32 %v424, %v461
        %v559 = vmul.f32 %v425, %v461
        %v560 = vmul.f32 %v426, %v461
        %v561 = vmul.f32 %v427, %v461
        %v562 = vmul.f32 %v428, %v461
        %v563 = vmul.f32 %v429, %v461
        %v564 = vmul.f32 %v430, %v461
        %v565 = vmul.f32 %v431, %v461
        %v566 = vmul.f32 %v432, %v461
        %v567 = vmul.f32 %v433, %v461
        %v568 = vmul.f32 %v434, %v461
        %v569 = vmul.f32 %v435, %v461
        %v570 = vmul.f32 %v436, %v461
        %v571 = vmul.f32 %v437, %v461
        %v572 = vmul.f32 %v438, %v461
        %v573 = vmul.f32 %v439, %v461
        %v574 = vmul.f32 %v440, %v461
        %v575 = vmul.f32 %v441, %v461
        %v576 = vmul.f32 %v442, %v461
        %v577 = vmul.f32 %v443, %v461
        %v578 = vmul.f32 %v444, %v461
        %v579 = vmul.f32 %v445, %v461
        %v580 = vmul.f32 %v446, %v461
        %v581 = vmul.f32 %v447, %v461
        %v582 = vmul.f32 %v448, %v461
        %v583 = vmul.f32 %v449, %v461
        %v584 = vmul.f32 %v450, %v461
        %v585 = vmul.f32 %v451, %v461
        %v586 = vmul.f32 %v452, %v461
        %v587 = vmul.f32 %v453, %v461
        %v588 = vmul.f32 %v454, %v461
        %v589 = vmul.f32 %v455, %v461
        %v590 = vmul.f32 %v456, %v461
        %591 = vst [vmem:[%s188] sm:$0xff] %v463
        %592 = vst [vmem:[%s188 + $0x8] sm:$0xff] %v464
        %593 = vst [vmem:[%s188 + $0x10] sm:$0xff] %v465
        %594 = vst [vmem:[%s188 + $0x18] sm:$0xff] %v466
        %595 = vst [vmem:[%s188 + $0x20] sm:$0xff] %v467
        %596 = vst [vmem:[%s188 + $0x28] sm:$0xff] %v468
        %597 = vst [vmem:[%s188 + $0x30] sm:$0xff] %v469
        %598 = vst [vmem:[%s188 + $0x38] sm:$0xff] %v470
        %599 = vst [vmem:[%s188 + $0x40] sm:$0xff] %v471
        %600 = vst [vmem:[%s188 + $0x48] sm:$0xff] %v472
        %601 = vst [vmem:[%s188 + $0x50] sm:$0xff] %v473
        %602 = vst [vmem:[%s188 + $0x58] sm:$0xff] %v474
        %603 = vst [vmem:[%s188 + $0x60] sm:$0xff] %v475
        %604 = vst [vmem:[%s188 + $0x68] sm:$0xff] %v476
        %605 = vst [vmem:[%s188 + $0x70] sm:$0xff] %v477
        %606 = vst [vmem:[%s188 + $0x78] sm:$0xff] %v478
        %607 = vst [vmem:[%s188 + $0x80] sm:$0xff] %v479
        %608 = vst [vmem:[%s188 + $0x88] sm:$0xff] %v480
        %609 = vst [vmem:[%s188 + $0x90] sm:$0xff] %v481
        %610 = vst [vmem:[%s188 + $0x98] sm:$0xff] %v482
        %611 = vst [vmem:[%s188 + $0xa0] sm:$0xff] %v483
        %612 = vst [vmem:[%s188 + $0xa8] sm:$0xff] %v484
        %613 = vst [vmem:[%s188 + $0xb0] sm:$0xff] %v485
        %614 = vst [vmem:[%s188 + $0xb8] sm:$0xff] %v486
        %615 = vst [vmem:[%s188 + $0xc0] sm:$0xff] %v487
        %616 = vst [vmem:[%s188 + $0xc8] sm:$0xff] %v488
        %617 = vst [vmem:[%s188 + $0xd0] sm:$0xff] %v489
        %618 = vst [vmem:[%s188 + $0xd8] sm:$0xff] %v490
        %619 = vst [vmem:[%s188 + $0xe0] sm:$0xff] %v491
        %620 = vst [vmem:[%s188 + $0xe8] sm:$0xff] %v492
        %621 = vst [vmem:[%s188 + $0xf0] sm:$0xff] %v493
        %622 = vst [vmem:[%s188 + $0xf8] sm:$0xff] %v494
        %623 = vst [vmem:[%s188 + $0x100] sm:$0xff] %v495
        %624 = vst [vmem:[%s188 + $0x108] sm:$0xff] %v496
        %625 = vst [vmem:[%s188 + $0x110] sm:$0xff] %v497
        %626 = vst [vmem:[%s188 + $0x118] sm:$0xff] %v498
        %627 = vst [vmem:[%s188 + $0x120] sm:$0xff] %v499
        %628 = vst [vmem:[%s188 + $0x128] sm:$0xff] %v500
        %629 = vst [vmem:[%s188 + $0x130] sm:$0xff] %v501
        %630 = vst [vmem:[%s188 + $0x138] sm:$0xff] %v502
        %631 = vst [vmem:[%s188 + $0x140] sm:$0xff] %v503
        %632 = vst [vmem:[%s188 + $0x148] sm:$0xff] %v504
        %633 = vst [vmem:[%s188 + $0x150] sm:$0xff] %v505
        %634 = vst [vmem:[%s188 + $0x158] sm:$0xff] %v506
        %635 = vst [vmem:[%s188 + $0x160] sm:$0xff] %v507
        %636 = vst [vmem:[%s188 + $0x168] sm:$0xff] %v508
        %637 = vst [vmem:[%s188 + $0x170] sm:$0xff] %v509
        %638 = vst [vmem:[%s188 + $0x178] sm:$0xff] %v510
        %639 = vst [vmem:[%s188 + $0x180] sm:$0xff] %v511
        %640 = vst [vmem:[%s188 + $0x188] sm:$0xff] %v512
        %641 = vst [vmem:[%s188 + $0x190] sm:$0xff] %v513
        %642 = vst [vmem:[%s188 + $0x198] sm:$0xff] %v514
        %643 = vst [vmem:[%s188 + $0x1a0] sm:$0xff] %v515
        %644 = vst [vmem:[%s188 + $0x1a8] sm:$0xff] %v516
        %645 = vst [vmem:[%s188 + $0x1b0] sm:$0xff] %v517
        %646 = vst [vmem:[%s188 + $0x1b8] sm:$0xff] %v518
        %647 = vst [vmem:[%s188 + $0x1c0] sm:$0xff] %v519
        %648 = vst [vmem:[%s188 + $0x1c8] sm:$0xff] %v520
        %649 = vst [vmem:[%s188 + $0x1d0] sm:$0xff] %v521
        %650 = vst [vmem:[%s188 + $0x1d8] sm:$0xff] %v522
        %651 = vst [vmem:[%s188 + $0x1e0] sm:$0xff] %v523
        %652 = vst [vmem:[%s188 + $0x1e8] sm:$0xff] %v524
        %653 = vst [vmem:[%s188 + $0x1f0] sm:$0xff] %v525
        %654 = vst [vmem:[%s188 + $0x1f8] sm:$0xff] %v526
        %655 = vst [vmem:[%s188 + $0x200] sm:$0xff] %v527
        %656 = vst [vmem:[%s188 + $0x208] sm:$0xff] %v528
        %657 = vst [vmem:[%s188 + $0x210] sm:$0xff] %v529
        %658 = vst [vmem:[%s188 + $0x218] sm:$0xff] %v530
        %659 = vst [vmem:[%s188 + $0x220] sm:$0xff] %v531
        %660 = vst [vmem:[%s188 + $0x228] sm:$0xff] %v532
        %661 = vst [vmem:[%s188 + $0x230] sm:$0xff] %v533
        %662 = vst [vmem:[%s188 + $0x238] sm:$0xff] %v534
        %663 = vst [vmem:[%s188 + $0x240] sm:$0xff] %v535
        %664 = vst [vmem:[%s188 + $0x248] sm:$0xff] %v536
        %665 = vst [vmem:[%s188 + $0x250] sm:$0xff] %v537
        %666 = vst [vmem:[%s188 + $0x258] sm:$0xff] %v538
        %667 = vst [vmem:[%s188 + $0x260] sm:$0xff] %v539
        %668 = vst [vmem:[%s188 + $0x268] sm:$0xff] %v540
        %669 = vst [vmem:[%s188 + $0x270] sm:$0xff] %v541
        %670 = vst [vmem:[%s188 + $0x278] sm:$0xff] %v542
        %671 = vst [vmem:[%s188 + $0x280] sm:$0xff] %v543
        %672 = vst [vmem:[%s188 + $0x288] sm:$0xff] %v544
        %673 = vst [vmem:[%s188 + $0x290] sm:$0xff] %v545
        %674 = vst [vmem:[%s188 + $0x298] sm:$0xff] %v546
        %675 = vst [vmem:[%s188 + $0x2a0] sm:$0xff] %v547
        %676 = vst [vmem:[%s188 + $0x2a8] sm:$0xff] %v548
        %677 = vst [vmem:[%s188 + $0x2b0] sm:$0xff] %v549
        %678 = vst [vmem:[%s188 + $0x2b8] sm:$0xff] %v550
        %679 = vst [vmem:[%s188 + $0x2c0] sm:$0xff] %v551
        %680 = vst [vmem:[%s188 + $0x2c8] sm:$0xff] %v552
        %681 = vst [vmem:[%s188 + $0x2d0] sm:$0xff] %v553
        %682 = vst [vmem:[%s188 + $0x2d8] sm:$0xff] %v554
        %683 = vst [vmem:[%s188 + $0x2e0] sm:$0xff] %v555
        %684 = vst [vmem:[%s188 + $0x2e8] sm:$0xff] %v556
        %685 = vst [vmem:[%s188 + $0x2f0] sm:$0xff] %v557
        %686 = vst [vmem:[%s188 + $0x2f8] sm:$0xff] %v558
        %687 = vst [vmem:[%s188 + $0x300] sm:$0xff] %v559
        %688 = vst [vmem:[%s188 + $0x308] sm:$0xff] %v560
        %689 = vst [vmem:[%s188 + $0x310] sm:$0xff] %v561
        %690 = vst [vmem:[%s188 + $0x318] sm:$0xff] %v562
        %691 = vst [vmem:[%s188 + $0x320] sm:$0xff] %v563
        %692 = vst [vmem:[%s188 + $0x328] sm:$0xff] %v564
        %693 = vst [vmem:[%s188 + $0x330] sm:$0xff] %v565
        %694 = vst [vmem:[%s188 + $0x338] sm:$0xff] %v566
        %695 = vst [vmem:[%s188 + $0x340] sm:$0xff] %v567
        %696 = vst [vmem:[%s188 + $0x348] sm:$0xff] %v568
        %697 = vst [vmem:[%s188 + $0x350] sm:$0xff] %v569
        %698 = vst [vmem:[%s188 + $0x358] sm:$0xff] %v570
        %699 = vst [vmem:[%s188 + $0x360] sm:$0xff] %v571
        %700 = vst [vmem:[%s188 + $0x368] sm:$0xff] %v572
        %701 = vst [vmem:[%s188 + $0x370] sm:$0xff] %v573
        %702 = vst [vmem:[%s188 + $0x378] sm:$0xff] %v574
        %703 = vst [vmem:[%s188 + $0x380] sm:$0xff] %v575
        %704 = vst [vmem:[%s188 + $0x388] sm:$0xff] %v576
        %705 = vst [vmem:[%s188 + $0x390] sm:$0xff] %v577
        %706 = vst [vmem:[%s188 + $0x398] sm:$0xff] %v578
        %707 = vst [vmem:[%s188 + $0x3a0] sm:$0xff] %v579
        %708 = vst [vmem:[%s188 + $0x3a8] sm:$0xff] %v580
        %709 = vst [vmem:[%s188 + $0x3b0] sm:$0xff] %v581
        %710 = vst [vmem:[%s188 + $0x3b8] sm:$0xff] %v582
        %711 = vst [vmem:[%s188 + $0x3c0] sm:$0xff] %v583
        %712 = vst [vmem:[%s188 + $0x3c8] sm:$0xff] %v584
        %713 = vst [vmem:[%s188 + $0x3d0] sm:$0xff] %v585
        %714 = vst [vmem:[%s188 + $0x3d8] sm:$0xff] %v586
        %715 = vst [vmem:[%s188 + $0x3e0] sm:$0xff] %v587
        %716 = vst [vmem:[%s188 + $0x3e8] sm:$0xff] %v588
        %717 = vst [vmem:[%s188 + $0x3f0] sm:$0xff] %v589
        %718 = vst [vmem:[%s188 + $0x3f8] sm:$0xff] %v590
        %s719 = sand.u32 %s96, 1
        %s720 = scalar_lea.sflag [#allocation4], %s719
        %s721 = sand.u32 %s96, 1
        %s722 = smul.addr %s721, 1024
        %s723 = scalar_lea.vmem [#allocation5], %s722
        // Predicated region
        $region37: #{tpu_custom_call.1} parent=31 // pred_check
          %p724 = pneg %p106
        $region38: #{tpu_custom_call.1} parent=31 // pred_check_branch
          %726 = sbr.rel (%p724) target = $region40
        $region39: #{tpu_custom_call.1} parent=31 // pred_region
          %s727 = smul.u32 128, %s20
          %s729 = ssub.s32 16384, 16384
          %730 = vsyncadd %s720, %s729
          %s731 = smul.addr %s727, 128
          %s732 = scalar_lea.hbm %s3, %s731
          %s733 = sshll.u32 %s723, 4
          %s734 = int_to_ptr.vmem [resolvable:$true] %s733
          %739 = dma.vmem_to_hbm [thread:$0]  %s734, 16384, %s732, %s720, 128, 128, 8
        $region40: #{tpu_custom_call.1} parent=31 // pred_fallthru
          _
      $region32: #{tpu_custom_call.1} parent=5 // pred_fallthru
        _
      %p740 = scmp.le.s32.totalorder 2, %s15
      // Predicated region
      $region41: #{tpu_custom_call.1} parent=5 // pred_check
        %p741 = pneg %p740
      $region42: #{tpu_custom_call.1} parent=5 // pred_check_branch
        %743 = sbr.rel (%p741) target = $region44
      $region43: #{tpu_custom_call.1} parent=5 // pred_region
        %s744 = ssub.s32 %s15, 2
        // Predicated region
        $region45: #{tpu_custom_call.1} parent=43 // pred_check
          %p745 = pneg %p112
        $region46: #{tpu_custom_call.1} parent=43 // pred_check_branch
          %747 = sbr.rel (%p745) target = $region48
        $region47: #{tpu_custom_call.1} parent=43 // pred_region
          %s748 = sand.u32 %s97, 1
          %s749 = scalar_lea.sflag [#allocation4], %s748
          %s750 = sand.u32 %s97, 1
          %s751 = smul.addr %s750, 1024
          %s752 = scalar_lea.vmem [#allocation5], %s751
          %753 = dma.done %s749, 16384
        $region48: #{tpu_custom_call.1} parent=43 // pred_fallthru
          _
      $region44: #{tpu_custom_call.1} parent=5 // pred_fallthru
        _
    $region6: #{tpu_custom_call.1} parent=1 // loop_footer
      %s19 = sadd.s32 1, %s15
    $region7: #{tpu_custom_call.1} parent=1 // loop_footer_branch
      %14 = sbr.rel target = $region3
    $region8: #{tpu_custom_call.1} parent=1 // loop_exit
      _
    %754 = vsyncpa [#allocation3], 1
    %s755 = scalar_lea.sflag [#allocation3], 1
    %756 = vsyncpa %s755, 1
    %757 = vsyncpa [#allocation4], 1
    %s758 = scalar_lea.sflag [#allocation4], 1
    %759 = vsyncpa %s758, 1

</llo_original>
